<compile_context>
chip_gen: v5e
topology: v5e:2x2
jax: 0.10.0
libtpu: 0.0.40
codegen_flags: <defaults>
</compile_context>

<pallas_src>
import functools

import jax
import jax.numpy as jnp
from jax import lax
from jax.experimental import pallas as pl
from jax.experimental.pallas import tpu as pltpu

LEAKY_SLOPE = 0.01        # nn.LeakyReLU default negative_slope
BN_EPS = 1e-5             # nn.BatchNorm1d default eps
_VMEM_LIMIT = 32 * 1024 * 1024   # safe scoped-VMEM budget on v5e / v6e / v7x


def _round_up(n, m):
    return (n + m - 1) // m * m


# ----------------------------- kernels ---------------------------------------


def _stats1_kernel(x_ref, w1_ref, stats_ref, *, m_true, tm):
    """Accumulate per-channel sum / sum-of-squares of h1 = x @ w1 over valid rows."""
    i = pl.program_id(0)

    @pl.when(i == 0)
    def _():
        stats_ref[...] = jnp.zeros_like(stats_ref)

    h = jnp.dot(x_ref[...], w1_ref[...], preferred_element_type=jnp.float32)
    row = i * tm + lax.broadcasted_iota(jnp.int32, (tm, 1), 0)
    h = jnp.where(row < m_true, h, 0.0)            # exclude padded rows from stats
    stats_ref[...] += jnp.concatenate(
        [jnp.sum(h, axis=0, keepdims=True),
         jnp.sum(h * h, axis=0, keepdims=True)], axis=0)


def _stats2_kernel(x_ref, w1_ref, s1_ref, t1_ref, w2_ref, stats_ref, *, m_true, tm):
    """Recompute layer 1, apply folded BN1 + LeakyReLU, h2 = . @ w2, accumulate stats."""
    i = pl.program_id(0)

    @pl.when(i == 0)
    def _():
        stats_ref[...] = jnp.zeros_like(stats_ref)

    h = jnp.dot(x_ref[...], w1_ref[...], preferred_element_type=jnp.float32)
    h = h * s1_ref[...] + t1_ref[...]
    h = jnp.where(h >= 0, h, LEAKY_SLOPE * h)
    h = jnp.dot(h, w2_ref[...], preferred_element_type=jnp.float32)
    row = i * tm + lax.broadcasted_iota(jnp.int32, (tm, 1), 0)
    h = jnp.where(row < m_true, h, 0.0)
    stats_ref[...] += jnp.concatenate(
        [jnp.sum(h, axis=0, keepdims=True),
         jnp.sum(h * h, axis=0, keepdims=True)], axis=0)


def _apply_kernel(x_ref, w1_ref, s1_ref, t1_ref, w2_ref, s2_ref, t2_ref,
                  wf_ref, bf_ref, out_ref):
    """Full MLP on one tile: (x@w1)*s1+t1 -> lrelu -> (@w2)*s2+t2 -> lrelu -> @wf+bf."""
    h = jnp.dot(x_ref[...], w1_ref[...], preferred_element_type=jnp.float32)
    h = h * s1_ref[...] + t1_ref[...]
    h = jnp.where(h >= 0, h, LEAKY_SLOPE * h)
    h = jnp.dot(h, w2_ref[...], preferred_element_type=jnp.float32)
    h = h * s2_ref[...] + t2_ref[...]
    h = jnp.where(h >= 0, h, LEAKY_SLOPE * h)
    y = jnp.dot(h, wf_ref[...], preferred_element_type=jnp.float32) + bf_ref[...]
    out_ref[...] = y.astype(out_ref.dtype)


# ----------------------------- wrapper ----------------------------------------


def _fold_bn(stats, gamma, beta, m_true):
    """stats = [[sum_c], [sumsq_c]]  ->  per-channel (scale, shift) for h*scale+shift."""
    mean = stats[0:1, :] / m_true
    var = jnp.maximum(stats[1:2, :] / m_true - mean * mean, 0.0)   # biased, as in BN train
    scale = gamma * lax.rsqrt(var + BN_EPS)
    shift = beta - mean * scale
    return scale, shift


def mlp_forward(x, params, *, tm_max=1024):
    input_shape = x.shape
    c_in = input_shape[-1]
    x2d = x.reshape(-1, c_in).astype(jnp.float32)     # one row per (batch, position)
    m_true = x2d.shape[0]

    w1, g1, be1 = params["w1"], params["g1"], params["be1"]
    w2, g2, be2 = params["w2"], params["g2"], params["be2"]
    wf, bf = params["wf"], params["bf"]
    h1, h2, c_out = w1.shape[1], w2.shape[1], wf.shape[1]
    # NOTE: b1/b2 (Conv1d biases feeding training-mode BatchNorm) cancel exactly in the
    # normalization and are intentionally not passed to the kernels.

    assert tm_max % 8 == 0
    tm = min(tm_max, _round_up(m_true, 8))            # sublane-aligned tile over M
    m_pad = _round_up(m_true, tm)
    if m_pad != m_true:
        x2d = jnp.pad(x2d, ((0, m_pad - m_true), (0, 0)))
    n_tiles = m_pad // tm

    x_spec = pl.BlockSpec((tm, c_in), lambda i: (i, 0))

    def const_spec(shape):                            # block index never changes -> no re-DMA
        return pl.BlockSpec(shape, lambda i: (0, 0))

    arb = pltpu.CompilerParams(dimension_semantics=("arbitrary",),
                               vmem_limit_bytes=_VMEM_LIMIT)
    par = pltpu.CompilerParams(dimension_semantics=("parallel",),
                               vmem_limit_bytes=_VMEM_LIMIT)

    # Pass 1: statistics of h1 = x @ w1 (accumulator output resident across the grid).
    stats1 = pl.pallas_call(
        functools.partial(_stats1_kernel, m_true=m_true, tm=tm),
        out_shape=jax.ShapeDtypeStruct((2, h1), jnp.float32),
        grid=(n_tiles,),
        in_specs=[x_spec, const_spec((c_in, h1))],
        out_specs=const_spec((2, h1)),
        compiler_params=arb,
    )(x2d, w1)
    s1, t1 = _fold_bn(stats1, g1, be1, m_true)

    # Pass 2: statistics of h2 (layer 1 recomputed; no (M, H) intermediate in HBM).
    stats2 = pl.pallas_call(
        functools.partial(_stats2_kernel, m_true=m_true, tm=tm),
        out_shape=jax.ShapeDtypeStruct((2, h2), jnp.float32),
        grid=(n_tiles,),
        in_specs=[x_spec, const_spec((c_in, h1)), const_spec((1, h1)),
                  const_spec((1, h1)), const_spec((h1, h2))],
        out_specs=const_spec((2, h2)),
        compiler_params=arb,
    )(x2d, w1, s1, t1, w2)
    s2, t2 = _fold_bn(stats2, g2, be2, m_true)

    # Pass 3: apply the whole MLP per tile ("parallel" over M for v7x megacore).
    y2d = pl.pallas_call(
        _apply_kernel,
        out_shape=jax.ShapeDtypeStruct((m_pad, c_out), x.dtype),
        grid=(n_tiles,),
        in_specs=[x_spec, const_spec((c_in, h1)), const_spec((1, h1)),
                  const_spec((1, h1)), const_spec((h1, h2)), const_spec((1, h2)),
                  const_spec((1, h2)), const_spec((h2, c_out)), const_spec((1, c_out))],
        out_specs=pl.BlockSpec((tm, c_out), lambda i: (i, 0)),
        compiler_params=par,
    )(x2d, w1, s1, t1, w2, s2, t2, wf, bf)

    return y2d[:m_true].reshape(*input_shape[:-1], c_out)


# ----------------------------- reference & init -------------------------------


def init_params(key, c_in, c_hiddens, c_out):
    """Deterministic synthetic init with non-trivial biases / gamma / beta."""
    assert len(c_hiddens) == 2, "kernel is specialized for two hidden layers"
    ks = jax.random.split(key, 8)
    d0, d1, d2 = c_in, c_hiddens[0], c_hiddens[1]

    def lin(kw, kb, di, do):
        w = jax.random.normal(kw, (di, do), jnp.float32) / jnp.sqrt(float(di))
        b = 0.1 * jax.random.normal(kb, (1, do), jnp.float32)
        return w, b

    w1, b1 = lin(ks[0], ks[1], d0, d1)
    w2, b2 = lin(ks[2], ks[3], d1, d2)
    wf, bf = lin(ks[4], ks[5], d2, c_out)
    g1 = 1.0 + 0.1 * jax.random.normal(ks[6], (1, d1), jnp.float32)
    g2 = 1.0 + 0.1 * jax.random.normal(ks[7], (1, d2), jnp.float32)
    be1 = jnp.full((1, d1), 0.05, jnp.float32)
    be2 = jnp.full((1, d2), -0.05, jnp.float32)
    return dict(w1=w1, b1=b1, g1=g1, be1=be1,
                w2=w2, b2=b2, g2=g2, be2=be2,
                wf=wf, bf=bf)


def mlp_reference(x, params):
    """Pure-JAX reference of the exact PyTorch math (includes b1/b2 — they cancel)."""
    input_shape = x.shape
    c = input_shape[-1]
    h = x.reshape(-1, c).astype(jnp.float32)
    for w, b, g, be in ((params["w1"], params["b1"], params["g1"], params["be1"]),
                        (params["w2"], params["b2"], params["g2"], params["be2"])):
        h = h @ w + b
        mean = h.mean(0, keepdims=True)
        var = ((h - mean) ** 2).mean(0, keepdims=True)
        h = (h - mean) / jnp.sqrt(var + BN_EPS) * g + be
        h = jnp.where(h >= 0, h, LEAKY_SLOPE * h)
    y = h @ params["wf"] + params["bf"]
    return y.reshape(*input_shape[:-1], y.shape[-1])


if __name__ == "__main__":
    c_in, c_hiddens, c_out = 8, (32, 32), 16
    x_shape = (2, 4, 15, c_in)          # M = 2*4*15 = 120 positions

    key = jax.random.PRNGKey(0)
    kx, kp = jax.random.split(key)
    x = jax.random.normal(kx, x_shape, dtype=jnp.float32)
    params = init_params(kp, c_in, c_hiddens, c_out)

    y_ref = mlp_reference(x, params)

    # tm_max=1024: single tile; tm_max=32: 4 tiles with a padded (masked) last tile.
    for tm_max in (1024, 32):
        y = mlp_forward(x, params, tm_max=tm_max)
        jax.block_until_ready(y)
        assert y.shape == (*x_shape[:-1], c_out), y.shape
        err = float(jnp.max(jnp.abs(y - y_ref)))
        assert jnp.allclose(y, y_ref, atol=1e-3, rtol=1e-3), err

    print("KERNEL_OK")
</pallas_src>

<mosaic_0001>
module attributes {stable_mosaic.version = 11 : i64} {
  func.func @_stats1_kernel(%arg0: i32, %arg1: memref<120x8xf32, #tpu.memory_space<vmem>>, %arg2: memref<8x32xf32, #tpu.memory_space<vmem>>, %arg3: memref<2x32xf32, #tpu.memory_space<vmem>>) attributes {dimension_semantics = [#tpu.dimension_semantics<arbitrary>], iteration_bounds = array<i64: 1>, scalar_prefetch = 0 : i64, scratch_operands = 0 : i64, tpu.core_type = #tpu.core_type<tc>, window_params = [{transform_indices = @transform_0, window_bounds = array<i64: 120, 8>}, {pipeline_mode = #tpu.pipeline_mode<synchronous>, transform_indices = @transform_1, window_bounds = array<i64: 8, 32>}, {pipeline_mode = #tpu.pipeline_mode<synchronous>, transform_indices = @transform_2, window_bounds = array<i64: 2, 32>}]} {
    %c0_i32 = arith.constant 0 : i32
    %0 = arith.cmpi eq, %arg0, %c0_i32 : i32
    %1 = arith.extui %0 : i1 to i32
    %c0_i32_0 = arith.constant 0 : i32
    %2 = arith.cmpi ne, %1, %c0_i32_0 : i32
    scf.if %2 {
      %cst_12 = arith.constant 0.000000e+00 : f32
      %25 = vector.broadcast %cst_12 : f32 to vector<2x32xf32>
      %c0_13 = arith.constant 0 : index
      %c0_14 = arith.constant 0 : index
      %26 = vector.load %arg3[%c0_13, %c0_14] : memref<2x32xf32, #tpu.memory_space<vmem>>, vector<2x32xf32>
      tpu.vector_store %arg3[%c0_13, %c0_14], %25 {strides = array<i32>} : memref<2x32xf32, #tpu.memory_space<vmem>>, vector<2x32xf32>,
    } else {
    }
    %c0 = arith.constant 0 : index
    %c0_1 = arith.constant 0 : index
    %3 = vector.load %arg1[%c0, %c0_1] : memref<120x8xf32, #tpu.memory_space<vmem>>, vector<120x8xf32>
    %c0_2 = arith.constant 0 : index
    %c0_3 = arith.constant 0 : index
    %4 = vector.load %arg2[%c0_2, %c0_3] : memref<8x32xf32, #tpu.memory_space<vmem>>, vector<8x32xf32>
    %cst = arith.constant dense<0.000000e+00> : vector<120x32xf32>
    %5 = tpu.matmul %3, %4, %cst {dimension_numbers = #tpu.dot_dimension_numbers<[1], [0], [0], [1], [0, 0, 1, 1], [], []>} : vector<120x8xf32>, vector<8x32xf32>, vector<120x32xf32> -> vector<120x32xf32>
    %c120_i32 = arith.constant 120 : i32
    %6 = arith.muli %arg0, %c120_i32 : i32
    %7 = tpu.iota {dimensions = array<i32: 0>} : vector<120x1xi32>
    %8 = vector.broadcast %6 : i32 to vector<120x1xi32>
    %9 = arith.addi %8, %7 : vector<120x1xi32>
    %c120_i32_4 = arith.constant 120 : i32
    %10 = vector.broadcast %c120_i32_4 : i32 to vector<120x1xi32>
    %11 = arith.cmpi slt, %9, %10 : vector<120x1xi32>
    %cst_5 = arith.constant 0.000000e+00 : f32
    %12 = vector.shape_cast %11 : vector<120x1xi1> to vector<120x1xi1>
    %13 = vector.broadcast %12 : vector<120x1xi1> to vector<120x32xi1>
    %14 = vector.broadcast %cst_5 : f32 to vector<120x32xf32>
    %15 = arith.select %13, %5, %14 : vector<120x32xi1>, vector<120x32xf32>
    %c0_6 = arith.constant 0 : index
    %c0_7 = arith.constant 0 : index
    %16 = vector.load %arg3[%c0_6, %c0_7] : memref<2x32xf32, #tpu.memory_space<vmem>>, vector<2x32xf32>
    %cst_8 = arith.constant dense<0.000000e+00> : vector<32xf32>
    %17 = vector.multi_reduction <add>, %15, %cst_8 [0] : vector<120x32xf32> to vector<32xf32>
    %18 = vector.shape_cast %17 : vector<32xf32> to vector<1x32xf32>
    %19 = arith.mulf %15, %15 : vector<120x32xf32>
    %cst_9 = arith.constant dense<0.000000e+00> : vector<32xf32>
    %20 = vector.multi_reduction <add>, %19, %cst_9 [0] : vector<120x32xf32> to vector<32xf32>
    %21 = vector.shape_cast %20 : vector<32xf32> to vector<1x32xf32>
    %22 = tpu.concatenate %18, %21 in 0 : vector<1x32xf32>, vector<1x32xf32> -> vector<2x32xf32>
    %23 = arith.addf %16, %22 : vector<2x32xf32>
    %c0_10 = arith.constant 0 : index
    %c0_11 = arith.constant 0 : index
    %24 = vector.load %arg3[%c0_10, %c0_11] : memref<2x32xf32, #tpu.memory_space<vmem>>, vector<2x32xf32>
    tpu.vector_store %arg3[%c0_10, %c0_11], %23 {strides = array<i32>} : memref<2x32xf32, #tpu.memory_space<vmem>>, vector<2x32xf32>,
    return
  }
  func.func @transform_0(%arg0: i32) -> (i32, i32) {
    %c0_i32 = arith.constant 0 : i32
    %c0_i32_0 = arith.constant 0 : i32
    return %arg0, %c0_i32 : i32, i32
  }
  func.func @transform_1(%arg0: i32) -> (i32, i32) {
    %c0_i32 = arith.constant 0 : i32
    %c0_i32_0 = arith.constant 0 : i32
    %c0_i32_1 = arith.constant 0 : i32
    return %c0_i32, %c0_i32_0 : i32, i32
  }
  func.func @transform_2(%arg0: i32) -> (i32, i32) {
    %c0_i32 = arith.constant 0 : i32
    %c0_i32_0 = arith.constant 0 : i32
    %c0_i32_1 = arith.constant 0 : i32
    return %c0_i32, %c0_i32_0 : i32, i32
  }
}

</mosaic_0001>

<llo_original>
// kernel: tpu_custom_call.1
$region0: #{tpu_custom_call.1}
  #allocation0 [shape = 'u32[]', space=smem, size = 0x4, offset = 0x4, fixed_abs, tag = 'smem constant byte address 0x4 - core index']
  #allocation1 [shape = 'u32[72,128]{1,0:T(1,128)}', space=vmem, size = 0x9000, scoped, tag = 'internal scratch']
  %s0 = inlined_call_operand.vmem [shape: f32[120,8], index: 0, kind: input, shape index: {}]
  %s1 = inlined_call_operand.vmem [shape: f32[8,32], index: 1, kind: input, shape index: {}]
  %s2 = inlined_call_operand.hbm [shape: f32[2,32], index: 2, kind: output, shape index: {}]
  %s3 = sld [smem:[#allocation0]]
  $region22: #{tpu_custom_call.1} parent=0
    _
  %s5 = ssub.s32 1, %s3
  %s6 = scalar_select 0, %s5, %s3
  $region1: #{tpu_custom_call.1} parent=0
    #allocation2 [shape = 'u8[1024]{0}', space=vmem, size = 0x400, scoped, tag = 'output window, operand 0, single buffered']
    #allocation3 [shape = 's32[1]{0}', space=sflag, size = 0x4, scoped, tag = 'scoped memory for tpu_custom_call.1']
    %7 = vsyncpa [#allocation3], 0
    // Predicated region
    $region2: #{tpu_custom_call.1} parent=1 // pred_check
      _
    $region3: #{tpu_custom_call.1} parent=1 // pred_check_branch
      %9 = sbr.rel (0) target = $region5
    $region4: #{tpu_custom_call.1} parent=1 // pred_region
      _
    $region5: #{tpu_custom_call.1} parent=1 // pred_fallthru
      _
    // Predicated region
    $region6: #{tpu_custom_call.1} parent=1 // pred_check
      _
    $region7: #{tpu_custom_call.1} parent=1 // pred_check_branch
      %11 = sbr.rel (0) target = $region9
    $region8: #{tpu_custom_call.1} parent=1 // pred_region
      _
    $region9: #{tpu_custom_call.1} parent=1 // pred_fallthru
      _
    %p12 = scmp.eq.s32.totalorder 0, 0
    // Predicated region
    $region10: #{tpu_custom_call.1} parent=1 // pred_check
      %p13 = pneg %p12
    $region11: #{tpu_custom_call.1} parent=1 // pred_check_branch
      %15 = sbr.rel (%p13) target = $region13
    $region12: #{tpu_custom_call.1} parent=1 // pred_region
      %vm16 = vcmask 254976
      %17 = vst.msk [vmem:[#allocation2] sm:$0x3] %vm16, 0.0
    $region13: #{tpu_custom_call.1} parent=1 // pred_fallthru
      _
    %v18 = vld [vmem:[%s0] sm:$0xff]
    %v19 = vld [vmem:[%s0 + $0x8] sm:$0xff]
    %v20 = vld [vmem:[%s0 + $0x10] sm:$0xff]
    %v21 = vld [vmem:[%s0 + $0x18] sm:$0xff]
    %v22 = vld [vmem:[%s0 + $0x20] sm:$0xff]
    %v23 = vld [vmem:[%s0 + $0x28] sm:$0xff]
    %v24 = vld [vmem:[%s0 + $0x30] sm:$0xff]
    %v25 = vld [vmem:[%s0 + $0x38] sm:$0xff]
    %v26 = vld [vmem:[%s0 + $0x40] sm:$0xff]
    %v27 = vld [vmem:[%s0 + $0x48] sm:$0xff]
    %v28 = vld [vmem:[%s0 + $0x50] sm:$0xff]
    %v29 = vld [vmem:[%s0 + $0x58] sm:$0xff]
    %v30 = vld [vmem:[%s0 + $0x60] sm:$0xff]
    %v31 = vld [vmem:[%s0 + $0x68] sm:$0xff]
    %v32 = vld [vmem:[%s0 + $0x70] sm:$0xff]
    %v33 = vld [vmem:[%s1] sm:$0xff]
    %vm34 = vcmask 64512
    %v36 = vsel %vm34, %v18, 0
    %v39 = vsel %vm34, %v19, 0
    %v42 = vsel %vm34, %v20, 0
    %v45 = vsel %vm34, %v21, 0
    %v48 = vsel %vm34, %v22, 0
    %v51 = vsel %vm34, %v23, 0
    %v54 = vsel %vm34, %v24, 0
    %v57 = vsel %vm34, %v25, 0
    %v60 = vsel %vm34, %v26, 0
    %v63 = vsel %vm34, %v27, 0
    %v66 = vsel %vm34, %v28, 0
    %v69 = vsel %vm34, %v29, 0
    %v72 = vsel %vm34, %v30, 0
    %v75 = vsel %vm34, %v31, 0
    %v78 = vsel %vm34, %v32, 0
    %80 = vmatpush.msra.mxu0 0.0
    %81 = vmatpush.msra.mxu0 0.0
    %82 = vmatpush.msra.mxu0 0.0
    %83 = vmatpush.msra.mxu0 0.0
    %84 = vmatpush.msra.mxu0 0.0
    %85 = vmatpush.msra.mxu0 0.0
    %86 = vmatpush.msra.mxu0 0.0
    %87 = vmatpush.msra.mxu0 0.0
    %88 = vmatpush.msra.mxu0 0.0
    %89 = vmatpush.msra.mxu0 0.0
    %90 = vmatpush.msra.mxu0 0.0
    %91 = vmatpush.msra.mxu0 0.0
    %92 = vmatpush.msra.mxu0 0.0
    %93 = vmatpush.msra.mxu0 0.0
    %94 = vmatpush.msra.mxu0 0.0
    %95 = vmatpush.msra.mxu0 %v33
    %96 = vmatmul.f32.gmra.mxu0 %v36
    %v97 = vpop.f32.mrf.mxu0
    %v98 = vadd.f32 0.0, %v97
    %99 = vmatmul.f32.gmra.mxu0 %v39
    %v100 = vpop.f32.mrf.mxu0
    %v101 = vadd.f32 0.0, %v100
    %102 = vmatmul.f32.gmra.mxu0 %v42
    %v103 = vpop.f32.mrf.mxu0
    %v104 = vadd.f32 0.0, %v103
    %105 = vmatmul.f32.gmra.mxu0 %v45
    %v106 = vpop.f32.mrf.mxu0
    %v107 = vadd.f32 0.0, %v106
    %108 = vmatmul.f32.gmra.mxu0 %v48
    %v109 = vpop.f32.mrf.mxu0
    %v110 = vadd.f32 0.0, %v109
    %111 = vmatmul.f32.gmra.mxu0 %v51
    %v112 = vpop.f32.mrf.mxu0
    %v113 = vadd.f32 0.0, %v112
    %114 = vmatmul.f32.gmra.mxu0 %v54
    %v115 = vpop.f32.mrf.mxu0
    %v116 = vadd.f32 0.0, %v115
    %117 = vmatmul.f32.gmra.mxu0 %v57
    %v118 = vpop.f32.mrf.mxu0
    %v119 = vadd.f32 0.0, %v118
    %120 = vmatmul.f32.gmra.mxu0 %v60
    %v121 = vpop.f32.mrf.mxu0
    %v122 = vadd.f32 0.0, %v121
    %123 = vmatmul.f32.gmra.mxu0 %v63
    %v124 = vpop.f32.mrf.mxu0
    %v125 = vadd.f32 0.0, %v124
    %126 = vmatmul.f32.gmra.mxu0 %v66
    %v127 = vpop.f32.mrf.mxu0
    %v128 = vadd.f32 0.0, %v127
    %129 = vmatmul.f32.gmra.mxu0 %v69
    %v130 = vpop.f32.mrf.mxu0
    %v131 = vadd.f32 0.0, %v130
    %132 = vmatmul.f32.gmra.mxu0 %v72
    %v133 = vpop.f32.mrf.mxu0
    %v134 = vadd.f32 0.0, %v133
    %135 = vmatmul.f32.gmra.mxu0 %v75
    %v136 = vpop.f32.mrf.mxu0
    %v137 = vadd.f32 0.0, %v136
    %138 = vmatmul.f32.gmra.mxu0 %v78
    %v139 = vpop.f32.mrf.mxu0
    %v140 = vadd.f32 0.0, %v139
    %141 = vdwg.mxu0
    %s142 = smul.u32 0, 120
    %v143 = vlaneseq
    %v144 = vshrl.u32 %v143, 7
    %v145 = vadd.s32 %v144, 8
    %v146 = vadd.s32 %v144, 16
    %v147 = vadd.s32 %v144, 24
    %v148 = vadd.s32 %v144, 32
    %v149 = vadd.s32 %v144, 40
    %v150 = vadd.s32 %v144, 48
    %v151 = vadd.s32 %v144, 56
    %v152 = vadd.s32 %v144, 64
    %v153 = vadd.s32 %v144, 72
    %v154 = vadd.s32 %v144, 80
    %v155 = vadd.s32 %v144, 88
    %v156 = vadd.s32 %v144, 96
    %v157 = vadd.s32 %v144, 104
    %v158 = vadd.s32 %v144, 112
    %v159 = vstv %s142
    %v160 = vadd.s32 %v159, %v144
    %v161 = vadd.s32 %v159, %v145
    %v162 = vadd.s32 %v159, %v146
    %v163 = vadd.s32 %v159, %v147
    %v164 = vadd.s32 %v159, %v148
    %v165 = vadd.s32 %v159, %v149
    %v166 = vadd.s32 %v159, %v150
    %v167 = vadd.s32 %v159, %v151
    %v168 = vadd.s32 %v159, %v152
    %v169 = vadd.s32 %v159, %v153
    %v170 = vadd.s32 %v159, %v154
    %v171 = vadd.s32 %v159, %v155
    %v172 = vadd.s32 %v159, %v156
    %v173 = vadd.s32 %v159, %v157
    %v174 = vadd.s32 %v159, %v158
    %vm175 = vcmp.lt.s32.totalorder %v160, 120
    %vm176 = vcmp.lt.s32.totalorder %v161, 120
    %vm177 = vcmp.lt.s32.totalorder %v162, 120
    %vm178 = vcmp.lt.s32.totalorder %v163, 120
    %vm179 = vcmp.lt.s32.totalorder %v164, 120
    %vm180 = vcmp.lt.s32.totalorder %v165, 120
    %vm181 = vcmp.lt.s32.totalorder %v166, 120
    %vm182 = vcmp.lt.s32.totalorder %v167, 120
    %vm183 = vcmp.lt.s32.totalorder %v168, 120
    %vm184 = vcmp.lt.s32.totalorder %v169, 120
    %vm185 = vcmp.lt.s32.totalorder %v170, 120
    %vm186 = vcmp.lt.s32.totalorder %v171, 120
    %vm187 = vcmp.lt.s32.totalorder %v172, 120
    %vm188 = vcmp.lt.s32.totalorder %v173, 120
    %vm189 = vcmp.lt.s32.totalorder %v174, 120
    %v190 = vsel %vm175, 1, 0
    %v191 = vsel %vm176, 1, 0
    %v192 = vsel %vm177, 1, 0
    %v193 = vsel %vm178, 1, 0
    %v194 = vsel %vm179, 1, 0
    %v195 = vsel %vm180, 1, 0
    %v196 = vsel %vm181, 1, 0
    %v197 = vsel %vm182, 1, 0
    %v198 = vsel %vm183, 1, 0
    %v199 = vsel %vm184, 1, 0
    %v200 = vsel %vm185, 1, 0
    %v201 = vsel %vm186, 1, 0
    %v202 = vsel %vm187, 1, 0
    %v203 = vsel %vm188, 1, 0
    %v204 = vsel %vm189, 1, 0
    %vm205 = vcmp.eq.s32.totalorder %v190, 1
    %vm206 = vcmp.eq.s32.totalorder %v191, 1
    %vm207 = vcmp.eq.s32.totalorder %v192, 1
    %vm208 = vcmp.eq.s32.totalorder %v193, 1
    %vm209 = vcmp.eq.s32.totalorder %v194, 1
    %vm210 = vcmp.eq.s32.totalorder %v195, 1
    %vm211 = vcmp.eq.s32.totalorder %v196, 1
    %vm212 = vcmp.eq.s32.totalorder %v197, 1
    %vm213 = vcmp.eq.s32.totalorder %v198, 1
    %vm214 = vcmp.eq.s32.totalorder %v199, 1
    %vm215 = vcmp.eq.s32.totalorder %v200, 1
    %vm216 = vcmp.eq.s32.totalorder %v201, 1
    %vm217 = vcmp.eq.s32.totalorder %v202, 1
    %vm218 = vcmp.eq.s32.totalorder %v203, 1
    %vm219 = vcmp.eq.s32.totalorder %v204, 1
    %v220 = vsel %vm205, %v98, 0.0
    %v221 = vsel %vm206, %v101, 0.0
    %v222 = vsel %vm207, %v104, 0.0
    %v223 = vsel %vm208, %v107, 0.0
    %v224 = vsel %vm209, %v110, 0.0
    %v225 = vsel %vm210, %v113, 0.0
    %v226 = vsel %vm211, %v116, 0.0
    %v227 = vsel %vm212, %v119, 0.0
    %v228 = vsel %vm213, %v122, 0.0
    %v229 = vsel %vm214, %v125, 0.0
    %v230 = vsel %vm215, %v128, 0.0
    %v231 = vsel %vm216, %v131, 0.0
    %v232 = vsel %vm217, %v134, 0.0
    %v233 = vsel %vm218, %v137, 0.0
    %v234 = vsel %vm219, %v140, 0.0
    %v235 = vld [vmem:[#allocation2] sm:$0x3]
    %vm236 = vcmask 261120
    %v237 = vsel %vm236, %v220, 0.0
    %v238 = vsel %vm236, %v221, 0.0
    %v239 = vadd.f32 %v237, %v238
    %v240 = vsel %vm236, %v222, 0.0
    %v241 = vadd.f32 %v239, %v240
    %v242 = vsel %vm236, %v223, 0.0
    %v243 = vadd.f32 %v241, %v242
    %v244 = vsel %vm236, %v224, 0.0
    %v245 = vadd.f32 %v243, %v244
    %v246 = vsel %vm236, %v225, 0.0
    %v247 = vadd.f32 %v245, %v246
    %v248 = vsel %vm236, %v226, 0.0
    %v249 = vadd.f32 %v247, %v248
    %v250 = vsel %vm236, %v227, 0.0
    %v251 = vadd.f32 %v249, %v250
    %v252 = vsel %vm236, %v228, 0.0
    %v253 = vadd.f32 %v251, %v252
    %v254 = vsel %vm236, %v229, 0.0
    %v255 = vadd.f32 %v253, %v254
    %v256 = vsel %vm236, %v230, 0.0
    %v257 = vadd.f32 %v255, %v256
    %v258 = vsel %vm236, %v231, 0.0
    %v259 = vadd.f32 %v257, %v258
    %v260 = vsel %vm236, %v232, 0.0
    %v261 = vadd.f32 %v259, %v260
    %v262 = vsel %vm236, %v233, 0.0
    %v263 = vadd.f32 %v261, %v262
    %v264 = vsel %vm236, %v234, 0.0
    %v265 = vadd.f32 %v263, %v264
    %v266 = vrot.slane %v265, 4
    %v267 = vadd.f32 %v265, %v266
    %v268 = vrot.slane %v267, 2
    %v269 = vadd.f32 %v267, %v268
    %v270 = vrot.slane %v269, 1
    %v271 = vadd.f32 %v269, %v270
    %v272 = vmul.f32 %v220, %v220
    %v273 = vmul.f32 %v221, %v221
    %v274 = vmul.f32 %v222, %v222
    %v275 = vmul.f32 %v223, %v223
    %v276 = vmul.f32 %v224, %v224
    %v277 = vmul.f32 %v225, %v225
    %v278 = vmul.f32 %v226, %v226
    %v279 = vmul.f32 %v227, %v227
    %v280 = vmul.f32 %v228, %v228
    %v281 = vmul.f32 %v229, %v229
    %v282 = vmul.f32 %v230, %v230
    %v283 = vmul.f32 %v231, %v231
    %v284 = vmul.f32 %v232, %v232
    %v285 = vmul.f32 %v233, %v233
    %v286 = vmul.f32 %v234, %v234
    %v287 = vsel %vm236, %v272, 0.0
    %v288 = vsel %vm236, %v273, 0.0
    %v289 = vadd.f32 %v287, %v288
    %v290 = vsel %vm236, %v274, 0.0
    %v291 = vadd.f32 %v289, %v290
    %v292 = vsel %vm236, %v275, 0.0
    %v293 = vadd.f32 %v291, %v292
    %v294 = vsel %vm236, %v276, 0.0
    %v295 = vadd.f32 %v293, %v294
    %v296 = vsel %vm236, %v277, 0.0
    %v297 = vadd.f32 %v295, %v296
    %v298 = vsel %vm236, %v278, 0.0
    %v299 = vadd.f32 %v297, %v298
    %v300 = vsel %vm236, %v279, 0.0
    %v301 = vadd.f32 %v299, %v300
    %v302 = vsel %vm236, %v280, 0.0
    %v303 = vadd.f32 %v301, %v302
    %v304 = vsel %vm236, %v281, 0.0
    %v305 = vadd.f32 %v303, %v304
    %v306 = vsel %vm236, %v282, 0.0
    %v307 = vadd.f32 %v305, %v306
    %v308 = vsel %vm236, %v283, 0.0
    %v309 = vadd.f32 %v307, %v308
    %v310 = vsel %vm236, %v284, 0.0
    %v311 = vadd.f32 %v309, %v310
    %v312 = vsel %vm236, %v285, 0.0
    %v313 = vadd.f32 %v311, %v312
    %v314 = vsel %vm236, %v286, 0.0
    %v315 = vadd.f32 %v313, %v314
    %v316 = vrot.slane %v315, 4
    %v317 = vadd.f32 %v315, %v316
    %v318 = vrot.slane %v317, 2
    %v319 = vadd.f32 %v317, %v318
    %v320 = vrot.slane %v319, 1
    %v321 = vadd.f32 %v319, %v320
    %vm322 = vcmask 1040384
    %v323 = vsel %vm322, %v271, %v321
    %v324 = vadd.f32 %v235, %v323
    %vm325 = vcmask 254976
    %326 = vst.msk [vmem:[#allocation2] sm:$0x3] %vm325, %v324
    // Predicated region
    $region14: #{tpu_custom_call.1} parent=1 // pred_check
      _
    $region15: #{tpu_custom_call.1} parent=1 // pred_check_branch
      %328 = sbr.rel (0) target = $region17
    $region16: #{tpu_custom_call.1} parent=1 // pred_region
      %330 = vsyncadd [#allocation3], 0
      %s332 = sshll.u32 [#allocation2], 4
      %s333 = int_to_ptr.vmem [resolvable:$true] %s332
      %s334 = sshll.u32 %s2, 4
      %s335 = int_to_ptr.hbm [resolvable:$true] %s334
      %337 = dma.vmem_to_hbm [thread:$0]  %s333, 32, %s335, [#allocation3]
    $region17: #{tpu_custom_call.1} parent=1 // pred_fallthru
      _
    // Predicated region
    $region18: #{tpu_custom_call.1} parent=1 // pred_check
      _
    $region19: #{tpu_custom_call.1} parent=1 // pred_check_branch
      %339 = sbr.rel (0) target = $region21
    $region20: #{tpu_custom_call.1} parent=1 // pred_region
      %341 = dma.done [#allocation3], 32
    $region21: #{tpu_custom_call.1} parent=1 // pred_fallthru
      _
    %342 = vsyncpa [#allocation3], 1

</llo_original>
